<compile_context>
chip_gen: v6e
topology: v6e:2x2x1
jax: 0.10.0
libtpu: 0.0.40
codegen_flags: <defaults>
</compile_context>

<pallas_src>
import functools

import jax
import jax.numpy as jnp
from jax import lax
from jax.experimental import pallas as pl
from jax.experimental.pallas import tpu as pltpu


def _flow_kernel(disp_ref, x_ref, o_ref, *, chunk: int, n_chunks: int):
    """One (batch, spatial-tile) grid step.

    disp_ref: (2, C, 1) f32 resident constants [dispU; dispV]
    x_ref   : (1, C, tile) input block  (C on sublanes, `tile` lanes)
    o_ref   : (1, 2, tile) output block
    """
    # Hoisted once per grid step (tiny (C, 1) loads).
    dU = disp_ref[0]                                      # (C, 1)
    dV = disp_ref[1]                                      # (C, 1)

    def process(off):
        x = x_ref[0, :, pl.ds(off, chunk)].astype(jnp.float32)   # (C, chunk)
        # softmin over C == softmax(-x); stabilize with the per-lane min.
        m = jnp.min(x, axis=0, keepdims=True)             # (1, chunk)
        e = jnp.exp(m - x)                                # (C, chunk)
        # Reduce first, normalize afterwards (saves a full C x chunk multiply).
        den = jnp.sum(e, axis=0, keepdims=True)           # (1, chunk)
        numU = jnp.sum(e * dU, axis=0, keepdims=True)     # (1, chunk)
        numV = jnp.sum(e * dV, axis=0, keepdims=True)     # (1, chunk)
        # Exact reciprocal; only touches (1, chunk), off the critical path.
        inv = pl.reciprocal(den, approx=False)
        # Direct lane-dense row stores (no concatenate / sublane repack).
        o_ref[0, 0:1, pl.ds(off, chunk)] = numU * inv
        o_ref[0, 1:2, pl.ds(off, chunk)] = numV * inv

    if n_chunks == 1:
        process(0)
    else:
        def body(i, carry):
            process(pl.multiple_of(i * chunk, chunk))
            return carry
        lax.fori_loop(0, n_chunks, body, 0,
                      unroll=True if n_chunks <= 8 else 8)


def _round_up(n: int, m: int) -> int:
    return ((n + m - 1) // m) * m


def _pick_tile(HW: int, C: int, B: int, tile_target: int, chunk_target: int):
    """Pick (tile, chunk, n_chunks): tile = n_chunks * chunk, chunk % 128 == 0."""
    chunk = min(chunk_target, _round_up(HW, 128))
    chunk = max(128, (chunk // 128) * 128)
    hw_chunks = pl.cdiv(HW, chunk)

    n = max(1, tile_target // chunk)
    # Keep one (C, tile) f32 input block <= ~8 MiB (v7x: 64 MiB physical VMEM,
    # double-buffered inputs + outputs stay well inside the scoped budget).
    n = min(n, max(1, (8 * 1024 * 1024) // (4 * C * chunk)))
    n = min(n, hw_chunks)
    # v7x megacore: keep the grid >= 2 programs when a single tile would cover
    # everything (no-op on single-core v5e/v6e).
    if B == 1 and hw_chunks >= 2:
        n = min(n, pl.cdiv(hw_chunks, 2))
    # Keep the unrolled inner loop tidy: full unroll up to 8, else 8-way.
    if n > 8:
        n = (n // 8) * 8
    return n * chunk, chunk, n


def flow_regression(x, maxU: int, maxV: int, *,
                    tile_spatial: int = 32768, chunk_spatial: int = 512):
    """x: (B, C, H, W) with C == (2*maxU+1)*(2*maxV+1). Returns (B, 2, H, W) f32."""
    sizeU = 2 * maxU + 1
    sizeV = 2 * maxV + 1
    B, C, H, W = x.shape
    assert C == sizeU * sizeV, "channel dim must equal (2*maxU+1)*(2*maxV+1)"
    HW = H * W

    tile, chunk, n_chunks = _pick_tile(HW, C, B, tile_spatial, chunk_spatial)
    n_spatial = pl.cdiv(HW, tile)
    grid = (B, n_spatial)

    x_flat = x.reshape(B, C, HW)

    # Displacement constants hoisted out of the kernel (tiny, VMEM-resident).
    ch = jnp.arange(C, dtype=jnp.int32)
    dispU = (ch // sizeV - maxU).astype(jnp.float32)
    dispV = (ch % sizeV - maxV).astype(jnp.float32)
    disp = jnp.stack([dispU, dispV], axis=0).reshape(2, C, 1)

    # VMEM budget from the actual footprint: double-buffered input + output
    # blocks, resident disp, plus headroom for chunk-sized temporaries.
    vmem_bytes = 2 * (C * tile * 4) + 2 * (2 * tile * 4) + 2 * C * 4 + (8 << 20)
    vmem_bytes = int(min(max(vmem_bytes, 16 << 20), 48 << 20))

    out_flat = pl.pallas_call(
        functools.partial(_flow_kernel, chunk=chunk, n_chunks=n_chunks),
        out_shape=jax.ShapeDtypeStruct((B, 2, HW), jnp.float32),
        grid_spec=pltpu.PrefetchScalarGridSpec(
            num_scalar_prefetch=0,
            grid=grid,
            in_specs=[
                # Constants: same block every step -> stays resident in VMEM.
                pl.BlockSpec((2, C, 1), lambda b, t: (0, 0, 0)),
                pl.BlockSpec((1, C, tile), lambda b, t: (b, 0, t)),
            ],
            out_specs=pl.BlockSpec((1, 2, tile), lambda b, t: (b, 0, t)),
        ),
        compiler_params=pltpu.CompilerParams(
            dimension_semantics=("parallel", "parallel"),
            vmem_limit_bytes=vmem_bytes,
        ),
    )(disp, x_flat)

    return out_flat.reshape(B, 2, H, W)


def _reference(x, maxU, maxV):
    """Pure-JAX reference mirroring the PyTorch forward."""
    sizeU = 2 * maxU + 1
    sizeV = 2 * maxV + 1
    B, C, H, W = x.shape
    p = jax.nn.softmax(-x.astype(jnp.float32), axis=1)
    dispU = jnp.arange(-maxU, maxU + 1, dtype=jnp.float32).reshape(1, sizeU, 1, 1, 1)
    dispU = jnp.broadcast_to(dispU, (B, sizeU, sizeV, H, W)).reshape(B, C, H, W)
    dispV = jnp.arange(-maxV, maxV + 1, dtype=jnp.float32).reshape(1, 1, sizeV, 1, 1)
    dispV = jnp.broadcast_to(dispV, (B, sizeU, sizeV, H, W)).reshape(B, C, H, W)
    flowU = jnp.sum(p * dispU, axis=1)
    flowV = jnp.sum(p * dispV, axis=1)
    return jnp.stack([flowU, flowV], axis=1)


if __name__ == "__main__":
    maxU, maxV = 2, 2                      # sizeU = sizeV = 5, C = 25
    C = (2 * maxU + 1) * (2 * maxV + 1)
    key = jax.random.PRNGKey(0)

    # Case 1: HW divisible by 128 (single full block per batch).
    B, H, W = 2, 16, 16
    x = jax.random.normal(key, (B, C, H, W), dtype=jnp.float32)
    out = jax.block_until_ready(flow_regression(x, maxU, maxV))
    ref = jax.block_until_ready(_reference(x, maxU, maxV))
    assert out.shape == (B, 2, H, W)
    assert jnp.allclose(out, ref, atol=1e-4, rtol=1e-4), "mismatch vs reference (case 1)"

    # Case 2: HW NOT divisible by 128 (masked partial block, no pad/crop).
    H2, W2 = 10, 10
    x2 = jax.random.normal(jax.random.PRNGKey(1), (B, C, H2, W2), dtype=jnp.float32)
    out2 = jax.block_until_ready(flow_regression(x2, maxU, maxV))
    ref2 = jax.block_until_ready(_reference(x2, maxU, maxV))
    assert out2.shape == (B, 2, H2, W2)
    assert jnp.allclose(out2, ref2, atol=1e-4, rtol=1e-4), "mismatch vs reference (case 2)"

    # Case 3: B=1, multi-chunk inner loop + partial spatial block + 2-block
    # spatial split (megacore path), bf16 input upcast on-chip.
    H3, W3 = 40, 40
    x3 = jax.random.normal(jax.random.PRNGKey(2), (1, C, H3, W3),
                           dtype=jnp.float32).astype(jnp.bfloat16)
    out3 = jax.block_until_ready(flow_regression(x3, maxU, maxV))
    ref3 = jax.block_until_ready(_reference(x3, maxU, maxV))
    assert out3.shape == (1, 2, H3, W3)
    assert jnp.allclose(out3, ref3, atol=5e-2, rtol=5e-2), "mismatch vs reference (case 3)"

    print("KERNEL_OK")
</pallas_src>

<mosaic_0001>
module attributes {stable_mosaic.version = 11 : i64} {
  func.func @_flow_kernel(%arg0: i32, %arg1: i32, %arg2: memref<2x25x1xf32, #tpu.memory_space<vmem>>, %arg3: memref<1x25x256xf32, #tpu.memory_space<vmem>>, %arg4: memref<1x2x256xf32, #tpu.memory_space<vmem>>) attributes {dimension_semantics = [#tpu.dimension_semantics<parallel>, #tpu.dimension_semantics<parallel>], iteration_bounds = array<i64: 2, 1>, scalar_prefetch = 0 : i64, scratch_operands = 0 : i64, tpu.core_type = #tpu.core_type<tc>, window_params = [{pipeline_mode = #tpu.pipeline_mode<synchronous>, transform_indices = @transform_0, window_bounds = array<i64: 2, 25, 1>}, {transform_indices = @transform_1, window_bounds = array<i64: 1, 25, 256>}, {transform_indices = @transform_2, window_bounds = array<i64: 1, 2, 256>}]} {
    %c0 = arith.constant 0 : index
    %c0_0 = arith.constant 0 : index
    %c0_1 = arith.constant 0 : index
    %0 = vector.load %arg2[%c0, %c0_0, %c0_1] : memref<2x25x1xf32, #tpu.memory_space<vmem>>, vector<1x25x1xf32>
    %1 = vector.shape_cast %0 : vector<1x25x1xf32> to vector<25x1xf32>
    %c1 = arith.constant 1 : index
    %c0_2 = arith.constant 0 : index
    %c0_3 = arith.constant 0 : index
    %2 = vector.load %arg2[%c1, %c0_2, %c0_3] : memref<2x25x1xf32, #tpu.memory_space<vmem>>, vector<1x25x1xf32>
    %3 = vector.shape_cast %2 : vector<1x25x1xf32> to vector<25x1xf32>
    %c0_4 = arith.constant 0 : index
    %c0_5 = arith.constant 0 : index
    %c0_6 = arith.constant 0 : index
    %4 = vector.load %arg3[%c0_4, %c0_5, %c0_6] : memref<1x25x256xf32, #tpu.memory_space<vmem>>, vector<1x25x256xf32>
    %5 = vector.shape_cast %4 : vector<1x25x256xf32> to vector<25x256xf32>
    %cst = arith.constant dense<0x7F800000> : vector<256xf32>
    %6 = vector.multi_reduction <minimumf>, %5, %cst [0] : vector<25x256xf32> to vector<256xf32>
    %7 = vector.shape_cast %6 : vector<256xf32> to vector<1x256xf32>
    %8 = vector.broadcast %7 : vector<1x256xf32> to vector<25x256xf32>
    %9 = arith.subf %8, %5 : vector<25x256xf32>
    %10 = math.exp %9 : vector<25x256xf32>
    %cst_7 = arith.constant dense<0.000000e+00> : vector<256xf32>
    %11 = vector.multi_reduction <add>, %10, %cst_7 [0] : vector<25x256xf32> to vector<256xf32>
    %12 = vector.shape_cast %11 : vector<256xf32> to vector<1x256xf32>
    %13 = vector.broadcast %1 : vector<25x1xf32> to vector<25x256xf32>
    %14 = arith.mulf %10, %13 : vector<25x256xf32>
    %cst_8 = arith.constant dense<0.000000e+00> : vector<256xf32>
    %15 = vector.multi_reduction <add>, %14, %cst_8 [0] : vector<25x256xf32> to vector<256xf32>
    %16 = vector.shape_cast %15 : vector<256xf32> to vector<1x256xf32>
    %17 = vector.broadcast %3 : vector<25x1xf32> to vector<25x256xf32>
    %18 = arith.mulf %10, %17 : vector<25x256xf32>
    %cst_9 = arith.constant dense<0.000000e+00> : vector<256xf32>
    %19 = vector.multi_reduction <add>, %18, %cst_9 [0] : vector<25x256xf32> to vector<256xf32>
    %20 = vector.shape_cast %19 : vector<256xf32> to vector<1x256xf32>
    %21 = tpu.reciprocal %12 : vector<1x256xf32> -> vector<1x256xf32>
    %22 = arith.mulf %16, %21 : vector<1x256xf32>
    %c0_10 = arith.constant 0 : index
    %c0_11 = arith.constant 0 : index
    %c0_12 = arith.constant 0 : index
    %23 = vector.load %arg4[%c0_10, %c0_11, %c0_12] : memref<1x2x256xf32, #tpu.memory_space<vmem>>, vector<1x1x256xf32>
    %24 = vector.shape_cast %23 : vector<1x1x256xf32> to vector<1x256xf32>
    %25 = vector.shape_cast %22 : vector<1x256xf32> to vector<1x1x256xf32>
    tpu.vector_store %arg4[%c0_10, %c0_11, %c0_12], %25 {strides = array<i32>} : memref<1x2x256xf32, #tpu.memory_space<vmem>>, vector<1x1x256xf32>,
    %26 = arith.mulf %20, %21 : vector<1x256xf32>
    %c0_13 = arith.constant 0 : index
    %c1_14 = arith.constant 1 : index
    %c0_15 = arith.constant 0 : index
    %27 = vector.load %arg4[%c0_13, %c1_14, %c0_15] : memref<1x2x256xf32, #tpu.memory_space<vmem>>, vector<1x1x256xf32>
    %28 = vector.shape_cast %27 : vector<1x1x256xf32> to vector<1x256xf32>
    %29 = vector.shape_cast %26 : vector<1x256xf32> to vector<1x1x256xf32>
    tpu.vector_store %arg4[%c0_13, %c1_14, %c0_15], %29 {strides = array<i32>} : memref<1x2x256xf32, #tpu.memory_space<vmem>>, vector<1x1x256xf32>,
    return
  }
  func.func @transform_0(%arg0: i32, %arg1: i32) -> (i32, i32, i32) {
    %c0_i32 = arith.constant 0 : i32
    %c0_i32_0 = arith.constant 0 : i32
    %c0_i32_1 = arith.constant 0 : i32
    %c0_i32_2 = arith.constant 0 : i32
    return %c0_i32, %c0_i32_0, %c0_i32_1 : i32, i32, i32
  }
  func.func @transform_1(%arg0: i32, %arg1: i32) -> (i32, i32, i32) {
    %c0_i32 = arith.constant 0 : i32
    %c0_i32_0 = arith.constant 0 : i32
    return %arg0, %c0_i32, %arg1 : i32, i32, i32
  }
  func.func @transform_2(%arg0: i32, %arg1: i32) -> (i32, i32, i32) {
    %c0_i32 = arith.constant 0 : i32
    %c0_i32_0 = arith.constant 0 : i32
    return %arg0, %c0_i32, %arg1 : i32, i32, i32
  }
}

</mosaic_0001>

<llo_original>
// kernel: tpu_custom_call.1
$region0: #{tpu_custom_call.1}
  #allocation0 [shape = 'u32[]', space=smem, size = 0x4, offset = 0x4, fixed_abs, tag = 'smem constant byte address 0x4 - core index']
  #allocation1 [shape = 'u32[144,128]{1,0:T(1,128)}', space=vmem, size = 0x12000, scoped, tag = 'internal scratch']
  %s0 = inlined_call_operand.vmem [shape: f32[2,25,1], index: 0, kind: input, shape index: {}]
  %s1 = inlined_call_operand.vmem [shape: f32[2,25,256], index: 1, kind: input, shape index: {}]
  %s2 = inlined_call_operand.hbm [shape: f32[2,2,256], index: 2, kind: output, shape index: {}]
  %s3 = sld [smem:[#allocation0]]
  $region41: #{tpu_custom_call.1} parent=0
    _
  %s5 = ssub.s32 1, %s3
  %s6 = scalar_select 0, %s5, %s3
  $region1: #{tpu_custom_call.1} parent=0
    #allocation2 [shape = 'u8[4096]{0}', space=vmem, size = 0x1000, scoped, tag = 'output window, operand 0']
    #allocation3 [shape = 's32[2]{0}', space=sflag, size = 0x8, scoped, tag = 'scoped memory for tpu_custom_call.1']
    %7 = vsyncpa [#allocation3], 0
    %s8 = scalar_lea.sflag [#allocation3], 1
    %9 = vsyncpa %s8, 0
    loop: start=0, step=1, limit=4
    $region2: #{tpu_custom_call.1} parent=1 // loop_pre_header
      _
    $region3: #{tpu_custom_call.1} parent=1 // loop_header
      %s11 = sphi 0, %s15
      %p12 = scmp.ge.s32.totalorder %s11, 4
      %s18 = sphi 0, %s30
      %s19 = sphi 0, %s26
      %s20 = sphi 0, %s18
      %s21 = sphi 0, %s19
      %s22 = sphi 0, %s20
      %s23 = sphi 0, %s21
      %s31 = sphi 0, %s31
      %s33 = sphi 0, %s31
      %s34 = sphi 0, %s33
      %s48 = sphi 0, %s34
      %s56 = sphi 0, %s58
      %s59 = sphi 0, %s56
      %s60 = sphi 0, %s59
      %s76 = sphi 0, %s60
      %s84 = sphi 0, %s86
      %s87 = sphi 0, %s84
      %s88 = sphi 0, %s87
      %s104 = sphi 0, %s88
    $region4: #{tpu_custom_call.1} parent=1 // loop_header_branch
      %14 = sbr.rel (%p12) target = $region8
    $region5: #{tpu_custom_call.1} parent=1 // loop_body
      %s16 = ssub.s32 %s11, 1
      %s17 = ssub.s32 %s11, 2
      %s24 = sadd.s32 1, %s19
      %p25 = scmp.ge.s32.totalorder %s24, 1
      %s26 = scalar_select %p25, 0, %s24
      %s27 = sadd.s32 1, %s18
      %s28 = scalar_select %p25, %s27, %s18
      %p29 = scmp.ge.s32.totalorder %s28, 2
      %s30 = scalar_select %p29, 0, %s28
      %s32 = sadd.s32 %s31, 1
      %p35 = scmp.eq.s32.totalorder %s11, 1
      %p36 = scmp.ne.s32.totalorder %s31, %s33
      %p37 = scmp.eq.s32.totalorder %s11, 0
      %p38 = por %p36, %p37
      %p39 = scmp.ne.s32.totalorder %s31, %s33
      %p40 = scmp.eq.s32.totalorder %s16, 1
      %p41 = por %p39, %p40
      %p42 = scmp.ne.s32.totalorder %s33, %s34
      %p43 = scmp.eq.s32.totalorder %s16, 0
      %p44 = por %p42, %p43
      %p45 = scmp.ne.s32.totalorder %s33, %s34
      %p46 = scmp.eq.s32.totalorder %s17, 1
      %p47 = por %p45, %p46
      %p49 = scmp.ne.s32.totalorder %s34, %s48
      %p50 = scmp.eq.s32.totalorder %s17, 0
      %p51 = por %p49, %p50
      %s52 = ssub.s32 %s18, %s30
      %s53 = ssub.s32 %s19, %s26
      %s54 = sor.u32 %s52, %s53
      %p55 = scmp.eq.s32.totalorder %s54, 0
      %s57 = sadd.s32 %s56, 1
      %s58 = scalar_select %p55, %s56, %s57
      %p61 = pneg %p55
      %p62 = scmp.eq.s32.totalorder %s11, 1
      %p63 = por %p61, %p62
      %p64 = scmp.ne.s32.totalorder %s56, %s59
      %p65 = scmp.eq.s32.totalorder %s11, 0
      %p66 = por %p64, %p65
      %p67 = scmp.ne.s32.totalorder %s56, %s59
      %p68 = scmp.eq.s32.totalorder %s16, 1
      %p69 = por %p67, %p68
      %p70 = scmp.ne.s32.totalorder %s59, %s60
      %p71 = scmp.eq.s32.totalorder %s16, 0
      %p72 = por %p70, %p71
      %p73 = scmp.ne.s32.totalorder %s59, %s60
      %p74 = scmp.eq.s32.totalorder %s17, 1
      %p75 = por %p73, %p74
      %p77 = scmp.ne.s32.totalorder %s60, %s76
      %p78 = scmp.eq.s32.totalorder %s17, 0
      %p79 = por %p77, %p78
      %s80 = ssub.s32 %s18, %s30
      %s81 = ssub.s32 %s19, %s26
      %s82 = sor.u32 %s80, %s81
      %p83 = scmp.eq.s32.totalorder %s82, 0
      %s85 = sadd.s32 %s84, 1
      %s86 = scalar_select %p83, %s84, %s85
      %p89 = pneg %p83
      %p90 = scmp.eq.s32.totalorder %s11, 1
      %p91 = por %p89, %p90
      %p92 = scmp.ne.s32.totalorder %s84, %s87
      %p93 = scmp.eq.s32.totalorder %s11, 0
      %p94 = por %p92, %p93
      %p95 = scmp.ne.s32.totalorder %s84, %s87
      %p96 = scmp.eq.s32.totalorder %s16, 1
      %p97 = por %p95, %p96
      %p98 = scmp.ne.s32.totalorder %s87, %s88
      %p99 = scmp.eq.s32.totalorder %s16, 0
      %p100 = por %p98, %p99
      %p101 = scmp.ne.s32.totalorder %s87, %s88
      %p102 = scmp.eq.s32.totalorder %s17, 1
      %p103 = por %p101, %p102
      %p105 = scmp.ne.s32.totalorder %s88, %s104
      %p106 = scmp.eq.s32.totalorder %s17, 0
      %p107 = por %p105, %p106
      %p108 = scmp.le.s32.totalorder 1, %s11
      %p109 = scmp.lt.s32.totalorder %s11, 3
      %p110 = pnand %p108, %p109
      %p111 = pneg %p110
      // Predicated region
      $region9: #{tpu_custom_call.1} parent=5 // pred_check
        _
      $region10: #{tpu_custom_call.1} parent=5 // pred_check_branch
        %113 = sbr.rel (%p110) target = $region12
      $region11: #{tpu_custom_call.1} parent=5 // pred_region
        %s114 = ssub.s32 %s11, 1
        // Predicated region
        $region13: #{tpu_custom_call.1} parent=11 // pred_check
          %p115 = pneg %p44
        $region14: #{tpu_custom_call.1} parent=11 // pred_check_branch
          %117 = sbr.rel (%p115) target = $region16
        $region15: #{tpu_custom_call.1} parent=11 // pred_region
          _
        $region16: #{tpu_custom_call.1} parent=11 // pred_fallthru
          _
      $region12: #{tpu_custom_call.1} parent=5 // pred_fallthru
        _
      %p118 = scmp.lt.s32.totalorder %s11, 2
      // Predicated region
      $region17: #{tpu_custom_call.1} parent=5 // pred_check
        %p119 = pneg %p118
      $region18: #{tpu_custom_call.1} parent=5 // pred_check_branch
        %121 = sbr.rel (%p119) target = $region20
      $region19: #{tpu_custom_call.1} parent=5 // pred_region
        // Predicated region
        $region21: #{tpu_custom_call.1} parent=19 // pred_check
          %p122 = pneg %p66
        $region22: #{tpu_custom_call.1} parent=19 // pred_check_branch
          %124 = sbr.rel (%p122) target = $region24
        $region23: #{tpu_custom_call.1} parent=19 // pred_region
          %s125 = smul.u32 2, %s19
          %p126 = scmp.lt.s32.totalorder %s18, 1
          %s127 = scalar_select %p126, %s18, 1
          %p128 = scmp.lt.s32.totalorder %s125, 1
          %s129 = scalar_select %p128, %s125, 1
          %s130 = smul.addr %s127, 8
          %s131 = sadd.s32 %s129, %s130
          %s132 = smul.addr %s131, 8
          %s133 = scalar_lea.vmem %s1, %s132
          %s134 = smul.u32 2, %s19
        $region24: #{tpu_custom_call.1} parent=19 // pred_fallthru
          _
      $region20: #{tpu_custom_call.1} parent=5 // pred_fallthru
        _
      %p135 = scmp.le.s32.totalorder 1, %s11
      %p136 = scmp.lt.s32.totalorder %s11, 3
      %p137 = pnand %p135, %p136
      %p138 = pneg %p137
      // Predicated region
      $region25: #{tpu_custom_call.1} parent=5 // pred_check
        _
      $region26: #{tpu_custom_call.1} parent=5 // pred_check_branch
        %140 = sbr.rel (%p137) target = $region28
      $region27: #{tpu_custom_call.1} parent=5 // pred_region
        %s141 = ssub.s32 %s11, 1
        %p142 = pneg %p44
        %p143 = pneg %p41
        %s144 = smul.u32 2, %s21
        %p145 = scmp.lt.s32.totalorder %s20, 1
        %s146 = scalar_select %p145, %s20, 1
        %p147 = scmp.lt.s32.totalorder %s144, 1
        %s148 = scalar_select %p147, %s144, 1
        %s149 = smul.addr %s146, 8
        %s150 = sadd.s32 %s148, %s149
        %s151 = smul.addr %s150, 8
        %s152 = scalar_lea.vmem %s1, %s151
        %p153 = pneg %p72
        %p154 = pneg %p69
        %p155 = pneg %p100
        %p156 = pneg %p97
        %s157 = sand.u32 %s87, 1
        %s158 = scalar_lea.sflag [#allocation3], %s157
        %s159 = sand.u32 %s87, 1
        %s160 = smul.addr %s159, 4
        %s161 = scalar_lea.vmem [#allocation2], %s160
        %s162 = smul.u32 2, %s21
        %p163 = scmp.lt.s32.totalorder %s20, 1
        %s164 = scalar_select %p163, %s20, 1
        %p165 = scmp.lt.s32.totalorder %s162, 1
        %s166 = scalar_select %p165, %s162, 1
        %s167 = smul.addr %s164, 8
        %s168 = sadd.s32 %s166, %s167
        %s169 = smul.addr %s168, 8
        %s170 = scalar_lea.vmem %s1, %s169
        %s171 = smul.u32 2, %s21
        %s172 = smul.u32 2, %s21
        %v173 = vld [vmem:[%s0] sm:$0xff]
        %v174 = vld [vmem:[%s0 + $0x8] sm:$0xff]
        %v175 = vld [vmem:[%s0 + $0x10] sm:$0xff]
        %v176 = vld [vmem:[%s0 + $0x18] sm:$0x1]
        %s177 = scalar_lea.vmem %s0, 32
        %v178 = vld [vmem:[%s177] sm:$0xff]
        %v179 = vld [vmem:[%s177 + $0x8] sm:$0xff]
        %v180 = vld [vmem:[%s177 + $0x10] sm:$0xff]
        %v181 = vld [vmem:[%s177 + $0x18] sm:$0x1]
        %v182 = vld [vmem:[%s170] sm:$0xff]
        %v183 = vld [vmem:[%s170 + $0x8] sm:$0xff]
        %v184 = vld [vmem:[%s170 + $0x10] sm:$0xff]
        %v185 = vld [vmem:[%s170 + $0x18] sm:$0xff]
        %v186 = vld [vmem:[%s170 + $0x20] sm:$0xff]
        %v187 = vld [vmem:[%s170 + $0x28] sm:$0xff]
        %v188 = vld [vmem:[%s170 + $0x30] sm:$0x1]
        %v189 = vld [vmem:[%s170 + $0x38] sm:$0x1]
        %v190 = vmin.f32 %v182, %v186
        %vm191 = vcmask 1040384
        %v192 = vsel %vm191, %v188, inf
        %v193 = vmin.f32 %v184, %v192
        %v194 = vmin.f32 %v190, %v193
        %v195 = vrot.slane %v194, 4
        %v196 = vmin.f32 %v194, %v195
        %v197 = vrot.slane %v196, 2
        %v198 = vmin.f32 %v196, %v197
        %v199 = vrot.slane %v198, 1
        %v200 = vmin.f32 %v198, %v199
        %v201 = vmin.f32 %v183, %v187
        %v202 = vsel %vm191, %v189, inf
        %v203 = vmin.f32 %v185, %v202
        %v204 = vmin.f32 %v201, %v203
        %v205 = vrot.slane %v204, 4
        %v206 = vmin.f32 %v204, %v205
        %v207 = vrot.slane %v206, 2
        %v208 = vmin.f32 %v206, %v207
        %v209 = vrot.slane %v208, 1
        %v210 = vmin.f32 %v208, %v209
        %v211 = vsub.f32 %v200, %v182
        %v212 = vsub.f32 %v210, %v183
        %v213 = vsub.f32 %v200, %v184
        %v214 = vsub.f32 %v210, %v185
        %v215 = vsub.f32 %v200, %v186
        %v216 = vsub.f32 %v210, %v187
        %v217 = vsub.f32 %v200, %v188
        %v218 = vsub.f32 %v210, %v189
        %v219 = vmul.f32 %v211, 1.442695
        %v220 = vpow.pop %v219
        %v221 = vmul.f32 %v212, 1.442695
        %v222 = vpow.pop %v221
        %v223 = vmul.f32 %v213, 1.442695
        %v224 = vpow.pop %v223
        %v225 = vmul.f32 %v214, 1.442695
        %v226 = vpow.pop %v225
        %v227 = vmul.f32 %v215, 1.442695
        %v228 = vpow.pop %v227
        %v229 = vmul.f32 %v216, 1.442695
        %v230 = vpow.pop %v229
        %v231 = vmul.f32 %v217, 1.442695
        %v232 = vpow.pop %v231
        %v233 = vmul.f32 %v218, 1.442695
        %v234 = vpow.pop %v233
        %v235 = vadd.f32 %v220, %v224
        %v236 = vadd.f32 %v235, %v228
        %v237 = vsel %vm191, %v232, 0.0
        %v238 = vadd.f32 %v236, %v237
        %v239 = vrot.slane %v238, 4
        %v240 = vadd.f32 %v238, %v239
        %v241 = vrot.slane %v240, 2
        %v242 = vadd.f32 %v240, %v241
        %v243 = vrot.slane %v242, 1
        %v244 = vadd.f32 %v242, %v243
        %v245 = vadd.f32 %v222, %v226
        %v246 = vadd.f32 %v245, %v230
        %v247 = vsel %vm191, %v234, 0.0
        %v248 = vadd.f32 %v246, %v247
        %v249 = vrot.slane %v248, 4
        %v250 = vadd.f32 %v248, %v249
        %v251 = vrot.slane %v250, 2
        %v252 = vadd.f32 %v250, %v251
        %v253 = vrot.slane %v252, 1
        %v254 = vadd.f32 %v252, %v253
        %256 = vset.pattern.permute.xlu0 0
        %257 = vperm.xlu0 %256, %v173
        %v258 = vpop.permute.xlu0 %257
        %261 = vset.pattern.permute.xlu0 0
        %262 = vperm.xlu0 %261, %v174
        %v263 = vpop.permute.xlu0 %262
        %266 = vset.pattern.permute.xlu0 0
        %267 = vperm.xlu0 %266, %v175
        %v268 = vpop.permute.xlu0 %267
        %271 = vset.pattern.permute.xlu0 0
        %272 = vperm.xlu0 %271, %v176
        %v273 = vpop.permute.xlu0 %272
        %v275 = vmul.f32 %v220, %v258
        %v276 = vmul.f32 %v222, %v258
        %v277 = vmul.f32 %v224, %v263
        %v278 = vmul.f32 %v226, %v263
        %v279 = vmul.f32 %v228, %v268
        %v280 = vmul.f32 %v230, %v268
        %v281 = vmul.f32 %v232, %v273
        %v282 = vmul.f32 %v234, %v273
        %v283 = vadd.f32 %v275, %v277
        %v284 = vadd.f32 %v283, %v279
        %v285 = vsel %vm191, %v281, 0.0
        %v286 = vadd.f32 %v284, %v285
        %v287 = vrot.slane %v286, 4
        %v288 = vadd.f32 %v286, %v287
        %v289 = vrot.slane %v288, 2
        %v290 = vadd.f32 %v288, %v289
        %v291 = vrot.slane %v290, 1
        %v292 = vadd.f32 %v290, %v291
        %v293 = vadd.f32 %v276, %v278
        %v294 = vadd.f32 %v293, %v280
        %v295 = vsel %vm191, %v282, 0.0
        %v296 = vadd.f32 %v294, %v295
        %v297 = vrot.slane %v296, 4
        %v298 = vadd.f32 %v296, %v297
        %v299 = vrot.slane %v298, 2
        %v300 = vadd.f32 %v298, %v299
        %v301 = vrot.slane %v300, 1
        %v302 = vadd.f32 %v300, %v301
        %304 = vset.pattern.permute.xlu0 0
        %305 = vperm.xlu0 %304, %v178
        %v306 = vpop.permute.xlu0 %305
        %309 = vset.pattern.permute.xlu0 0
        %310 = vperm.xlu0 %309, %v179
        %v311 = vpop.permute.xlu0 %310
        %314 = vset.pattern.permute.xlu0 0
        %315 = vperm.xlu0 %314, %v180
        %v316 = vpop.permute.xlu0 %315
        %319 = vset.pattern.permute.xlu0 0
        %320 = vperm.xlu0 %319, %v181
        %v321 = vpop.permute.xlu0 %320
        %v323 = vmul.f32 %v220, %v306
        %v324 = vmul.f32 %v222, %v306
        %v325 = vmul.f32 %v224, %v311
        %v326 = vmul.f32 %v226, %v311
        %v327 = vmul.f32 %v228, %v316
        %v328 = vmul.f32 %v230, %v316
        %v329 = vmul.f32 %v232, %v321
        %v330 = vmul.f32 %v234, %v321
        %v331 = vadd.f32 %v323, %v325
        %v332 = vadd.f32 %v331, %v327
        %v333 = vsel %vm191, %v329, 0.0
        %v334 = vadd.f32 %v332, %v333
        %v335 = vrot.slane %v334, 4
        %v336 = vadd.f32 %v334, %v335
        %v337 = vrot.slane %v336, 2
        %v338 = vadd.f32 %v336, %v337
        %v339 = vrot.slane %v338, 1
        %v340 = vadd.f32 %v338, %v339
        %v341 = vadd.f32 %v324, %v326
        %v342 = vadd.f32 %v341, %v328
        %v343 = vsel %vm191, %v330, 0.0
        %v344 = vadd.f32 %v342, %v343
        %v345 = vrot.slane %v344, 4
        %v346 = vadd.f32 %v344, %v345
        %v347 = vrot.slane %v346, 2
        %v348 = vadd.f32 %v346, %v347
        %v349 = vrot.slane %v348, 1
        %v350 = vadd.f32 %v348, %v349
        %v351 = vrcp.pop %v244
        %v352 = vrcp.pop %v254
        %v353 = vmul.f32 %v292, %v351
        %v354 = vmul.f32 %v302, %v352
        %v357 = vcombine.low %v353, %v354
        %v359 = vunpack.c.l.s4 1966171168
        %v360 = vunpack.c.0.s8 %v359
        %v361 = vlaneseq
        %v362 = vshrl.u32 %v361, 7
        %v363 = vsub.s32 %v360, %v362
        %v364 = vrot.slane %v357, %v363
        %v366 = vunpack.c.l.s4 1966171168
        %v367 = vunpack.c.0.s8 %v366
        %v368 = vlaneseq
        %v369 = vshrl.u32 %v368, 7
        %v370 = vsub.s32 %v367, %v369
        %v371 = vrot.slane %v364, %v370
        %v373 = vlaneseq
        %vm374 = vcmp.ge.s32.totalorder %v373, 0
        %vm375 = vcmp.lt.s32.totalorder %v373, 256
        %vm376 = vmand %vm374, %vm375
        %377 = vst.msk [vmem:[%s161] ss:$2 sm:$0x3] %vm376, %v371
        %v378 = vmul.f32 %v340, %v351
        %v379 = vmul.f32 %v350, %v352
        %v382 = vcombine.low %v378, %v379
        %v384 = vunpack.c.l.s4 1966171168
        %v385 = vunpack.c.0.s8 %v384
        %v386 = vlaneseq
        %v387 = vshrl.u32 %v386, 7
        %v388 = vsub.s32 %v385, %v387
        %v389 = vrot.slane %v382, %v388
        %v391 = vunpack.c.l.s4 1966171168
        %v392 = vunpack.c.0.s8 %v391
        %v393 = vlaneseq
        %v394 = vshrl.u32 %v393, 7
        %v395 = vsub.s32 %v392, %v394
        %v396 = vrot.slane %v389, %v395
        %s398 = scalar_lea.vmem %s161, 1 [#allocation2]
        %399 = vst.msk [vmem:[%s398] ss:$2 sm:$0x3] %vm376, %v396
        %s400 = sand.u32 %s87, 1
        %s401 = scalar_lea.sflag [#allocation3], %s400
        %s402 = sand.u32 %s87, 1
        %s403 = smul.addr %s402, 4
        %s404 = scalar_lea.vmem [#allocation2], %s403
        // Predicated region
        $region29: #{tpu_custom_call.1} parent=27 // pred_check
          %p405 = pneg %p97
        $region30: #{tpu_custom_call.1} parent=27 // pred_check_branch
          %407 = sbr.rel (%p405) target = $region32
        $region31: #{tpu_custom_call.1} parent=27 // pred_region
          %s408 = smul.u32 2, %s21
          %s410 = ssub.s32 64, 64
          %411 = vsyncadd %s401, %s410
          %s412 = smul.addr %s20, 2
          %s413 = sadd.s32 %s408, %s412
          %s414 = smul.addr %s413, 32
          %s415 = scalar_lea.hbm %s2, %s414
          %s417 = sshll.u32 %s404, 4
          %s418 = int_to_ptr.vmem [resolvable:$true] %s417
          %420 = dma.vmem_to_hbm [thread:$0]  %s418, 64, %s415, %s401
        $region32: #{tpu_custom_call.1} parent=27 // pred_fallthru
          _
      $region28: #{tpu_custom_call.1} parent=5 // pred_fallthru
        _
      %p421 = scmp.le.s32.totalorder 2, %s11
      // Predicated region
      $region33: #{tpu_custom_call.1} parent=5 // pred_check
        %p422 = pneg %p421
      $region34: #{tpu_custom_call.1} parent=5 // pred_check_branch
        %424 = sbr.rel (%p422) target = $region36
      $region35: #{tpu_custom_call.1} parent=5 // pred_region
        %s425 = ssub.s32 %s11, 2
        // Predicated region
        $region37: #{tpu_custom_call.1} parent=35 // pred_check
          %p426 = pneg %p103
        $region38: #{tpu_custom_call.1} parent=35 // pred_check_branch
          %428 = sbr.rel (%p426) target = $region40
        $region39: #{tpu_custom_call.1} parent=35 // pred_region
          %s429 = sand.u32 %s88, 1
          %s430 = scalar_lea.sflag [#allocation3], %s429
          %s431 = sand.u32 %s88, 1
          %s432 = smul.addr %s431, 4
          %s433 = scalar_lea.vmem [#allocation2], %s432
          %434 = dma.done %s430, 64
        $region40: #{tpu_custom_call.1} parent=35 // pred_fallthru
          _
      $region36: #{tpu_custom_call.1} parent=5 // pred_fallthru
        _
    $region6: #{tpu_custom_call.1} parent=1 // loop_footer
      %s15 = sadd.s32 1, %s11
    $region7: #{tpu_custom_call.1} parent=1 // loop_footer_branch
      %10 = sbr.rel target = $region3
    $region8: #{tpu_custom_call.1} parent=1 // loop_exit
      _
    %435 = vsyncpa [#allocation3], 1
    %s436 = scalar_lea.sflag [#allocation3], 1
    %437 = vsyncpa %s436, 1

</llo_original>
